<compile_context>
chip_gen: v7x
topology: tpu7x:2x2x1
jax: 0.10.0
libtpu: 0.0.40
codegen_flags: <defaults>
</compile_context>

<pallas_src>
import functools
import math

import jax
import jax.numpy as jnp
from jax.experimental import pallas as pl
from jax.experimental.pallas import tpu as pltpu


def _actnorm_kernel(x_ref, p_ref, y_ref, *, reverse, compute_dtype):
    """Elementwise affine: forward (x + b) * s, reverse x * s - b.

    p_ref is the fused (2, Cp) parameter slab: row 0 = bias, row 1 = the
    precomputed exp(+logs) / exp(-logs).  compute_dtype is f32 on v5e / for
    f32 inputs, bf16 on v6e/v7x for bf16 inputs (bf16-native VPU)."""
    x = x_ref[...].astype(compute_dtype)        # (rb, cb)
    b = p_ref[0:1, :].astype(compute_dtype)     # (1, cb), VMEM-resident
    s = p_ref[1:2, :].astype(compute_dtype)     # (1, cb), VMEM-resident
    if not reverse:
        y = (x + b) * s
    else:
        y = x * s - b
    y_ref[...] = y.astype(y_ref.dtype)


def _round_up(x, m):
    return (x + m - 1) // m * m


def _tpu_device_kind():
    try:
        return jax.devices()[0].device_kind.lower()
    except Exception:
        return ""


def _actnorm_pallas_2d(x2d, bias_row, scale_row, *, reverse,
                       target_tile_bytes, compute_in_f32, vmem_limit_bytes):
    """Run the elementwise affine on a lane-dense (rows, lanes) array."""
    Np, Cp = x2d.shape
    itemsize = jnp.dtype(x2d.dtype).itemsize
    # packed sublane tile: 8 for 32-bit, 16 for bf16, 32 for int8/fp8
    sublane = {4: 8, 2: 16, 1: 32}.get(itemsize, 8)

    compute_dtype = jnp.float32 if compute_in_f32 else x2d.dtype
    param_dtype = jnp.float32 if compute_in_f32 else x2d.dtype
    params = jnp.concatenate(
        [bias_row.astype(param_dtype), scale_row.astype(param_dtype)],
        axis=0)                                               # (2, Cp)

    row_bytes = Cp * itemsize
    if Cp % 128 == 0 and sublane * row_bytes > target_tile_bytes:
        # Very wide channels: even a minimum-height row slab exceeds the tile
        # budget -> split the lane dimension into a second grid axis.
        rb = sublane
        cb = max(128, (target_tile_bytes // (rb * itemsize)) // 128 * 128)
        cb = min(cb, Cp)
    else:
        cb = Cp
        rb = max(sublane,
                 (target_tile_bytes // max(row_bytes, 1)) // sublane * sublane)
        rb = min(rb, _round_up(Np, sublane))
        # Even (>=4 when rows allow) step count on the row axis: balanced
        # split across v7x's two TensorCores with per-core double buffering.
        steps = pl.cdiv(Np, rb)
        if Np >= 4 * sublane:
            steps = max(steps, 4)
        elif Np >= 2 * sublane:
            steps = max(steps, 2)
        if steps > 1 and steps % 2 != 0:
            steps += 1
        rb = min(_round_up(pl.cdiv(Np, steps), sublane), _round_up(Np, sublane))

    grid = (pl.cdiv(Np, rb), pl.cdiv(Cp, cb))   # partial blocks are masked

    kernel = functools.partial(_actnorm_kernel, reverse=bool(reverse),
                               compute_dtype=compute_dtype)

    cost = pl.CostEstimate(
        flops=2 * Np * Cp,
        transcendentals=0,
        bytes_accessed=2 * Np * Cp * itemsize
        + 2 * Cp * jnp.dtype(param_dtype).itemsize,
    )

    return pl.pallas_call(
        kernel,
        out_shape=jax.ShapeDtypeStruct((Np, Cp), x2d.dtype),
        grid_spec=pltpu.PrefetchScalarGridSpec(
            num_scalar_prefetch=0,
            grid=grid,
            in_specs=[
                pl.BlockSpec((rb, cb), lambda i, j: (i, j)),   # x tile
                pl.BlockSpec((2, cb), lambda i, j: (0, j)),    # bias+scale
            ],
            out_specs=pl.BlockSpec((rb, cb), lambda i, j: (i, j)),  # y tile
        ),
        compiler_params=pltpu.CompilerParams(
            dimension_semantics=("parallel", "parallel"),
            vmem_limit_bytes=vmem_limit_bytes),
        cost_estimate=cost,
    )(x2d, params)


def actnorm_forward(x, bias, logs, logdet=None, seq_len=1, reverse=False,
                    *, target_tile_bytes=None, vmem_limit_bytes=None):
    """Pallas implementation of ActNorm2d.forward (post data-dependent init).

    x: (N, C); bias/logs: (1, C); logdet: any shape broadcastable with a
    scalar (same contract as the PyTorch module)."""
    N, C = x.shape
    kind = _tpu_device_kind()
    is_v5 = "v5" in kind
    if target_tile_bytes is None:
        # ~4 MiB tiles on v6e/v7x (double-buffered in+out ~= 16 MiB fits the
        # 32 MiB scoped-VMEM default); conservative 2 MiB on v5e / unknown.
        target_tile_bytes = (2 * 1024 * 1024) if (is_v5 or not kind) \
            else (4 * 1024 * 1024)
    # bf16-native compute on v6e/v7x; f32 compute on v5e and for f32 inputs.
    compute_in_f32 = (x.dtype == jnp.float32) or is_v5 or not kind

    bias_row = bias.reshape(1, C).astype(jnp.float32)
    logs_row = logs.reshape(1, C).astype(jnp.float32)
    scale_row = jnp.exp(-logs_row) if reverse else jnp.exp(logs_row)

    # Lane-dense packing: fold k rows so the lane dim is a multiple of 128.
    if C % 128 == 0:
        k = 1
    else:
        k = 128 // math.gcd(C, 128)

    N_main = (N // k) * k
    outs = []
    if N_main > 0:
        Np, Cp = N_main // k, C * k
        x_main = x[:N_main].reshape(Np, Cp)
        bias_p = jnp.tile(bias_row, (1, k))      # (1, Cp)
        scale_p = jnp.tile(scale_row, (1, k))    # (1, Cp)
        y_main = _actnorm_pallas_2d(
            x_main, bias_p, scale_p, reverse=reverse,
            target_tile_bytes=target_tile_bytes,
            compute_in_f32=compute_in_f32,
            vmem_limit_bytes=vmem_limit_bytes).reshape(N_main, C)
        outs.append(y_main)
    if N_main < N:
        # < k leftover rows: plain XLA tail instead of forfeiting lane-dense
        # stores on the whole tensor (review item 1).
        x_rem = x[N_main:].astype(jnp.float32)
        if not reverse:
            y_rem = (x_rem + bias_row) * scale_row
        else:
            y_rem = x_rem * scale_row - bias_row
        outs.append(y_rem.astype(x.dtype))
    y = outs[0] if len(outs) == 1 else jnp.concatenate(outs, axis=0)

    # logdet: scalar affine update of whatever the caller passed, done in
    # plain JAX (XLA fuses it); exactly matches PyTorch's
    #   logdet + sum(logs) * seq_len   (sign-flipped in reverse).
    if logdet is not None:
        dlogdet = jnp.sum(logs.astype(jnp.float32)) * seq_len
        if reverse:
            dlogdet = -dlogdet
        logdet = logdet + dlogdet.astype(logdet.dtype)
    return y, logdet


def initialize_parameters(x, scale=1.0):
    """Data-dependent init (ActNorm2d.initialize_parameters), plain-JAX glue.

    Mirrors the PyTorch training-time first-call side effect that fills
    `bias` and `logs` from the minibatch statistics."""
    bias = -jnp.mean(x, axis=0, keepdims=True)                 # (1, C)
    var = jnp.mean((x + bias) ** 2, axis=0, keepdims=True)     # (1, C)
    logs = jnp.log(scale / (jnp.sqrt(var) + 1e-6))             # (1, C)
    return bias, logs


if __name__ == "__main__":
    key = jax.random.PRNGKey(0)
    kx, kl, kx2, kl2 = jax.random.split(key, 4)

    # small shapes consistent with the module: N = batch(*seq) rows, C = num_features
    N, C = 64, 32
    seq_len = 1

    x = jax.random.normal(kx, (N, C), jnp.float32) * 1.5 + 0.3
    logdet = jax.random.normal(kl, (N,), jnp.float32)

    # deterministic parameter init (reproduces the module's data-dependent init)
    bias, logs = initialize_parameters(x, scale=1.0)

    # forward
    y, logdet_out = actnorm_forward(x, bias, logs, logdet,
                                    seq_len=seq_len, reverse=False)
    y = jax.block_until_ready(y)
    logdet_out = jax.block_until_ready(logdet_out)

    # pure-JAX reference of the PyTorch forward
    y_ref = (x + bias) * jnp.exp(logs)
    logdet_ref = logdet + jnp.sum(logs) * seq_len
    assert jnp.allclose(y, y_ref, atol=1e-5, rtol=1e-5)
    assert jnp.allclose(logdet_out, logdet_ref, atol=1e-5, rtol=1e-5)

    # reverse path: round-trips back to the input
    x_rec, logdet_rec = actnorm_forward(y, bias, logs, logdet_out,
                                        seq_len=seq_len, reverse=True)
    x_rec = jax.block_until_ready(x_rec)
    logdet_rec = jax.block_until_ready(logdet_rec)
    assert jnp.allclose(x_rec, x, atol=1e-4, rtol=1e-4)
    assert jnp.allclose(logdet_rec, logdet, atol=1e-5, rtol=1e-5)

    # awkward N (not divisible by the packing factor k=4): packed Pallas
    # prefix + plain-XLA tail must still match the reference exactly.
    N2 = 67
    x2 = jax.random.normal(kx2, (N2, C), jnp.float32) * 0.7 - 0.1
    logdet2 = jax.random.normal(kl2, (N2,), jnp.float32)
    y2, logdet2_out = actnorm_forward(x2, bias, logs, logdet2,
                                      seq_len=seq_len, reverse=False)
    y2 = jax.block_until_ready(y2)
    y2_ref = (x2 + bias) * jnp.exp(logs)
    logdet2_ref = logdet2 + jnp.sum(logs) * seq_len
    assert jnp.allclose(y2, y2_ref, atol=1e-5, rtol=1e-5)
    assert jnp.allclose(logdet2_out, logdet2_ref, atol=1e-5, rtol=1e-5)

    print("KERNEL_OK")
</pallas_src>

<mosaic_0001>
module attributes {stable_mosaic.version = 11 : i64} {
  func.func @_actnorm_kernel(%arg0: i32, %arg1: i32, %arg2: memref<8x128xf32, #tpu.memory_space<vmem>>, %arg3: memref<2x128xf32, #tpu.memory_space<vmem>>, %arg4: memref<8x128xf32, #tpu.memory_space<vmem>>) attributes {dimension_semantics = [#tpu.dimension_semantics<parallel>, #tpu.dimension_semantics<parallel>], iteration_bounds = array<i64: 2, 1>, scalar_prefetch = 0 : i64, scratch_operands = 0 : i64, tpu.core_type = #tpu.core_type<tc>, window_params = [{transform_indices = @transform_0, window_bounds = array<i64: 8, 128>}, {transform_indices = @transform_1, window_bounds = array<i64: 2, 128>}, {transform_indices = @transform_2, window_bounds = array<i64: 8, 128>}]} {
    %c0 = arith.constant 0 : index
    %c0_0 = arith.constant 0 : index
    %0 = vector.load %arg2[%c0, %c0_0] : memref<8x128xf32, #tpu.memory_space<vmem>>, vector<8x128xf32>
    %c0_1 = arith.constant 0 : index
    %c0_2 = arith.constant 0 : index
    %1 = vector.load %arg3[%c0_1, %c0_2] : memref<2x128xf32, #tpu.memory_space<vmem>>, vector<1x128xf32>
    %c1 = arith.constant 1 : index
    %c0_3 = arith.constant 0 : index
    %2 = vector.load %arg3[%c1, %c0_3] : memref<2x128xf32, #tpu.memory_space<vmem>>, vector<1x128xf32>
    %3 = vector.broadcast %1 : vector<1x128xf32> to vector<8x128xf32>
    %4 = arith.addf %0, %3 : vector<8x128xf32>
    %5 = vector.broadcast %2 : vector<1x128xf32> to vector<8x128xf32>
    %6 = arith.mulf %4, %5 : vector<8x128xf32>
    %c0_4 = arith.constant 0 : index
    %c0_5 = arith.constant 0 : index
    %7 = vector.load %arg4[%c0_4, %c0_5] : memref<8x128xf32, #tpu.memory_space<vmem>>, vector<8x128xf32>
    tpu.vector_store %arg4[%c0_4, %c0_5], %6 {strides = array<i32>} : memref<8x128xf32, #tpu.memory_space<vmem>>, vector<8x128xf32>,
    return
  }
  func.func @transform_0(%arg0: i32, %arg1: i32) -> (i32, i32) {
    %c0_i32 = arith.constant 0 : i32
    return %arg0, %arg1 : i32, i32
  }
  func.func @transform_1(%arg0: i32, %arg1: i32) -> (i32, i32) {
    %c0_i32 = arith.constant 0 : i32
    %c0_i32_0 = arith.constant 0 : i32
    return %c0_i32, %arg1 : i32, i32
  }
  func.func @transform_2(%arg0: i32, %arg1: i32) -> (i32, i32) {
    %c0_i32 = arith.constant 0 : i32
    return %arg0, %arg1 : i32, i32
  }
}

</mosaic_0001>

<llo_original>
// kernel: tpu_custom_call.1
$region0: #{tpu_custom_call.1}
  #allocation0 [shape = 'u32[]', space=smem, size = 0x4, offset = 0x4, fixed_abs, tag = 'smem constant byte address 0x4 - core index']
  #allocation1 [shape = 'u32[144,128]{1,0:T(1,128)}', space=vmem, size = 0x12000, scoped, tag = 'internal scratch']
  %s0 = inlined_call_operand.hbm [shape: f32[16,128], index: 0, kind: input, shape index: {}]
  %s1 = inlined_call_operand.vmem [shape: f32[2,128], index: 1, kind: input, shape index: {}]
  %s2 = inlined_call_operand.hbm [shape: f32[16,128], index: 2, kind: output, shape index: {}]
  %s3 = sld [smem:[#allocation0]]
  $region45: #{tpu_custom_call.1} parent=0
    _
  %s5 = ssub.s32 1, %s3
  %s6 = scalar_select 0, %s5, %s3
  $region1: #{tpu_custom_call.1} parent=0
    #allocation2 [shape = 'u8[8192]{0}', space=vmem, size = 0x2000, scoped, tag = 'input window, operand 0']
    #allocation3 [shape = 's32[2]{0}', space=sflag, size = 0x8, scoped, tag = 'scoped memory for tpu_custom_call.1']
    #allocation4 [shape = 's32[2]{0}', space=sflag, size = 0x8, scoped, tag = 'scoped memory for tpu_custom_call.1']
    #allocation5 [shape = 'u8[8192]{0}', space=vmem, size = 0x2000, scoped, tag = 'output window, operand 0']
    %7 = vsyncpa [#allocation3], 0
    %s8 = scalar_lea.sflag [#allocation3], 1
    %9 = vsyncpa %s8, 0
    %10 = vsyncpa [#allocation4], 0
    %s11 = scalar_lea.sflag [#allocation4], 1
    %12 = vsyncpa %s11, 0
    loop: start=0, step=1, limit=4
    $region2: #{tpu_custom_call.1} parent=1 // loop_pre_header
      _
    $region3: #{tpu_custom_call.1} parent=1 // loop_header
      %s14 = sphi 0, %s18
      %p15 = scmp.ge.s32.totalorder %s14, 4
      %s21 = sphi 0, %s33
      %s22 = sphi 0, %s29
      %s23 = sphi 0, %s21
      %s24 = sphi 0, %s22
      %s25 = sphi 0, %s23
      %s26 = sphi 0, %s24
      %s38 = sphi 0, %s40
      %s41 = sphi 0, %s38
      %s42 = sphi 0, %s41
      %s58 = sphi 0, %s42
      %s64 = sphi 0, %s66
      %s67 = sphi 0, %s64
      %s68 = sphi 0, %s67
      %s84 = sphi 0, %s68
      %s92 = sphi 0, %s94
      %s95 = sphi 0, %s92
      %s96 = sphi 0, %s95
      %s112 = sphi 0, %s96
    $region4: #{tpu_custom_call.1} parent=1 // loop_header_branch
      %17 = sbr.rel (%p15) target = $region8
    $region5: #{tpu_custom_call.1} parent=1 // loop_body
      %s19 = ssub.s32 %s14, 1
      %s20 = ssub.s32 %s14, 2
      %s27 = sadd.s32 1, %s22
      %p28 = scmp.ge.s32.totalorder %s27, 1
      %s29 = scalar_select %p28, 0, %s27
      %s30 = sadd.s32 1, %s21
      %s31 = scalar_select %p28, %s30, %s21
      %p32 = scmp.ge.s32.totalorder %s31, 2
      %s33 = scalar_select %p32, 0, %s31
      %s34 = ssub.s32 %s21, %s33
      %s35 = ssub.s32 %s22, %s29
      %s36 = sor.u32 %s34, %s35
      %p37 = scmp.eq.s32.totalorder %s36, 0
      %s39 = sadd.s32 %s38, 1
      %s40 = scalar_select %p37, %s38, %s39
      %p43 = pneg %p37
      %p44 = scmp.eq.s32.totalorder %s14, 1
      %p45 = por %p43, %p44
      %p46 = scmp.ne.s32.totalorder %s38, %s41
      %p47 = scmp.eq.s32.totalorder %s14, 0
      %p48 = por %p46, %p47
      %p49 = scmp.ne.s32.totalorder %s38, %s41
      %p50 = scmp.eq.s32.totalorder %s19, 1
      %p51 = por %p49, %p50
      %p52 = scmp.ne.s32.totalorder %s41, %s42
      %p53 = scmp.eq.s32.totalorder %s19, 0
      %p54 = por %p52, %p53
      %p55 = scmp.ne.s32.totalorder %s41, %s42
      %p56 = scmp.eq.s32.totalorder %s20, 1
      %p57 = por %p55, %p56
      %p59 = scmp.ne.s32.totalorder %s42, %s58
      %p60 = scmp.eq.s32.totalorder %s20, 0
      %p61 = por %p59, %p60
      %s62 = ssub.s32 %s22, %s29
      %p63 = scmp.eq.s32.totalorder %s62, 0
      %s65 = sadd.s32 %s64, 1
      %s66 = scalar_select %p63, %s64, %s65
      %p69 = pneg %p63
      %p70 = scmp.eq.s32.totalorder %s14, 1
      %p71 = por %p69, %p70
      %p72 = scmp.ne.s32.totalorder %s64, %s67
      %p73 = scmp.eq.s32.totalorder %s14, 0
      %p74 = por %p72, %p73
      %p75 = scmp.ne.s32.totalorder %s64, %s67
      %p76 = scmp.eq.s32.totalorder %s19, 1
      %p77 = por %p75, %p76
      %p78 = scmp.ne.s32.totalorder %s67, %s68
      %p79 = scmp.eq.s32.totalorder %s19, 0
      %p80 = por %p78, %p79
      %p81 = scmp.ne.s32.totalorder %s67, %s68
      %p82 = scmp.eq.s32.totalorder %s20, 1
      %p83 = por %p81, %p82
      %p85 = scmp.ne.s32.totalorder %s68, %s84
      %p86 = scmp.eq.s32.totalorder %s20, 0
      %p87 = por %p85, %p86
      %s88 = ssub.s32 %s21, %s33
      %s89 = ssub.s32 %s22, %s29
      %s90 = sor.u32 %s88, %s89
      %p91 = scmp.eq.s32.totalorder %s90, 0
      %s93 = sadd.s32 %s92, 1
      %s94 = scalar_select %p91, %s92, %s93
      %p97 = pneg %p91
      %p98 = scmp.eq.s32.totalorder %s14, 1
      %p99 = por %p97, %p98
      %p100 = scmp.ne.s32.totalorder %s92, %s95
      %p101 = scmp.eq.s32.totalorder %s14, 0
      %p102 = por %p100, %p101
      %p103 = scmp.ne.s32.totalorder %s92, %s95
      %p104 = scmp.eq.s32.totalorder %s19, 1
      %p105 = por %p103, %p104
      %p106 = scmp.ne.s32.totalorder %s95, %s96
      %p107 = scmp.eq.s32.totalorder %s19, 0
      %p108 = por %p106, %p107
      %p109 = scmp.ne.s32.totalorder %s95, %s96
      %p110 = scmp.eq.s32.totalorder %s20, 1
      %p111 = por %p109, %p110
      %p113 = scmp.ne.s32.totalorder %s96, %s112
      %p114 = scmp.eq.s32.totalorder %s20, 0
      %p115 = por %p113, %p114
      %p116 = scmp.le.s32.totalorder 1, %s14
      %p117 = scmp.lt.s32.totalorder %s14, 3
      %p118 = pnand %p116, %p117
      %p119 = pneg %p118
      // Predicated region
      $region9: #{tpu_custom_call.1} parent=5 // pred_check
        _
      $region10: #{tpu_custom_call.1} parent=5 // pred_check_branch
        %121 = sbr.rel (%p118) target = $region12
      $region11: #{tpu_custom_call.1} parent=5 // pred_region
        %s122 = ssub.s32 %s14, 1
        // Predicated region
        $region13: #{tpu_custom_call.1} parent=11 // pred_check
          %p123 = pneg %p80
        $region14: #{tpu_custom_call.1} parent=11 // pred_check_branch
          %125 = sbr.rel (%p123) target = $region16
        $region15: #{tpu_custom_call.1} parent=11 // pred_region
          %p126 = scmp.lt.s32.totalorder %s24, 0
          %s127 = scalar_select %p126, %s24, 0
          %s128 = smul.addr %s127, 2
          %s129 = scalar_lea.vmem %s1, %s128
        $region16: #{tpu_custom_call.1} parent=11 // pred_fallthru
          _
      $region12: #{tpu_custom_call.1} parent=5 // pred_fallthru
        _
      %p130 = scmp.lt.s32.totalorder %s14, 2
      // Predicated region
      $region17: #{tpu_custom_call.1} parent=5 // pred_check
        %p131 = pneg %p130
      $region18: #{tpu_custom_call.1} parent=5 // pred_check_branch
        %133 = sbr.rel (%p131) target = $region20
      $region19: #{tpu_custom_call.1} parent=5 // pred_region
        // Predicated region
        $region21: #{tpu_custom_call.1} parent=19 // pred_check
          %p134 = pneg %p48
        $region22: #{tpu_custom_call.1} parent=19 // pred_check_branch
          %136 = sbr.rel (%p134) target = $region24
        $region23: #{tpu_custom_call.1} parent=19 // pred_region
          %s137 = sand.u32 %s38, 1
          %s138 = scalar_lea.sflag [#allocation3], %s137
          %s139 = sand.u32 %s38, 1
          %s140 = smul.addr %s139, 8
          %s141 = scalar_lea.vmem [#allocation2], %s140
          %s143 = ssub.s32 128, 128
          %144 = vsyncadd %s138, %s143
          %s145 = sadd.s32 %s22, %s21
          %s146 = smul.addr %s145, 128
          %s147 = scalar_lea.hbm %s0, %s146
          %s149 = sshll.u32 %s141, 4
          %s150 = int_to_ptr.vmem [resolvable:$true] %s149
          %152 = dma.hbm_to_vmem [thread:$0]  %s147, 128, %s150, %s138
        $region24: #{tpu_custom_call.1} parent=19 // pred_fallthru
          _
      $region20: #{tpu_custom_call.1} parent=5 // pred_fallthru
        _
      %p153 = scmp.le.s32.totalorder 1, %s14
      %p154 = scmp.lt.s32.totalorder %s14, 3
      %p155 = pnand %p153, %p154
      %p156 = pneg %p155
      // Predicated region
      $region25: #{tpu_custom_call.1} parent=5 // pred_check
        _
      $region26: #{tpu_custom_call.1} parent=5 // pred_check_branch
        %158 = sbr.rel (%p155) target = $region28
      $region27: #{tpu_custom_call.1} parent=5 // pred_region
        %s159 = ssub.s32 %s14, 1
        %s160 = sand.u32 %s41, 1
        %s161 = scalar_lea.sflag [#allocation3], %s160
        %s162 = sand.u32 %s41, 1
        %s163 = smul.addr %s162, 8
        %s164 = scalar_lea.vmem [#allocation2], %s163
        // Predicated region
        $region29: #{tpu_custom_call.1} parent=27 // pred_check
          %p165 = pneg %p54
        $region30: #{tpu_custom_call.1} parent=27 // pred_check_branch
          %167 = sbr.rel (%p165) target = $region32
        $region31: #{tpu_custom_call.1} parent=27 // pred_region
          %168 = dma.done %s161, 128
        $region32: #{tpu_custom_call.1} parent=27 // pred_fallthru
          _
        %s169 = sand.u32 %s41, 1
        %s170 = scalar_lea.sflag [#allocation3], %s169
        %s171 = sand.u32 %s41, 1
        %s172 = smul.addr %s171, 8
        %s173 = scalar_lea.vmem [#allocation2], %s172
        %p174 = pneg %p54
        %p175 = pneg %p51
        %p176 = scmp.lt.s32.totalorder %s24, 0
        %s177 = scalar_select %p176, %s24, 0
        %s178 = smul.addr %s177, 2
        %s179 = scalar_lea.vmem %s1, %s178
        %p180 = pneg %p80
        %p181 = pneg %p77
        %p182 = pneg %p108
        %p183 = pneg %p105
        %s184 = sand.u32 %s95, 1
        %s185 = scalar_lea.sflag [#allocation4], %s184
        %s186 = sand.u32 %s95, 1
        %s187 = smul.addr %s186, 8
        %s188 = scalar_lea.vmem [#allocation5], %s187
        %p189 = scmp.lt.s32.totalorder %s24, 0
        %s190 = scalar_select %p189, %s24, 0
        %s191 = smul.addr %s190, 2
        %s192 = scalar_lea.vmem %s1, %s191
        %v193 = vld [vmem:[%s164] sm:$0xff]
        %v194 = vld [vmem:[%s192] sm:$0x1]
        %v195 = vld [vmem:[%s192 + $0x1] sm:$0x1]
        %v196 = vlaneseq
        %v197 = vshrl.u32 %v196, 7
        %v198 = vsub.s32 0, %v197
        %v199 = vrot.slane %v194, %v198
        %v200 = vadd.f32 %v193, %v199
        %v201 = vlaneseq
        %v202 = vshrl.u32 %v201, 7
        %v203 = vsub.s32 0, %v202
        %v204 = vrot.slane %v195, %v203
        %v205 = vmul.f32 %v200, %v204
        %206 = vst [vmem:[%s188] sm:$0xff] %v205
        %s207 = sand.u32 %s95, 1
        %s208 = scalar_lea.sflag [#allocation4], %s207
        %s209 = sand.u32 %s95, 1
        %s210 = smul.addr %s209, 8
        %s211 = scalar_lea.vmem [#allocation5], %s210
        // Predicated region
        $region33: #{tpu_custom_call.1} parent=27 // pred_check
          %p212 = pneg %p105
        $region34: #{tpu_custom_call.1} parent=27 // pred_check_branch
          %214 = sbr.rel (%p212) target = $region36
        $region35: #{tpu_custom_call.1} parent=27 // pred_region
          %s216 = ssub.s32 128, 128
          %217 = vsyncadd %s208, %s216
          %s218 = sadd.s32 %s24, %s23
          %s219 = smul.addr %s218, 128
          %s220 = scalar_lea.hbm %s2, %s219
          %s222 = sshll.u32 %s211, 4
          %s223 = int_to_ptr.vmem [resolvable:$true] %s222
          %225 = dma.vmem_to_hbm [thread:$0]  %s223, 128, %s220, %s208
        $region36: #{tpu_custom_call.1} parent=27 // pred_fallthru
          _
      $region28: #{tpu_custom_call.1} parent=5 // pred_fallthru
        _
      %p226 = scmp.le.s32.totalorder 2, %s14
      // Predicated region
      $region37: #{tpu_custom_call.1} parent=5 // pred_check
        %p227 = pneg %p226
      $region38: #{tpu_custom_call.1} parent=5 // pred_check_branch
        %229 = sbr.rel (%p227) target = $region40
      $region39: #{tpu_custom_call.1} parent=5 // pred_region
        %s230 = ssub.s32 %s14, 2
        // Predicated region
        $region41: #{tpu_custom_call.1} parent=39 // pred_check
          %p231 = pneg %p111
        $region42: #{tpu_custom_call.1} parent=39 // pred_check_branch
          %233 = sbr.rel (%p231) target = $region44
        $region43: #{tpu_custom_call.1} parent=39 // pred_region
          %s234 = sand.u32 %s96, 1
          %s235 = scalar_lea.sflag [#allocation4], %s234
          %s236 = sand.u32 %s96, 1
          %s237 = smul.addr %s236, 8
          %s238 = scalar_lea.vmem [#allocation5], %s237
          %239 = dma.done %s235, 128
        $region44: #{tpu_custom_call.1} parent=39 // pred_fallthru
          _
      $region40: #{tpu_custom_call.1} parent=5 // pred_fallthru
        _
    $region6: #{tpu_custom_call.1} parent=1 // loop_footer
      %s18 = sadd.s32 1, %s14
    $region7: #{tpu_custom_call.1} parent=1 // loop_footer_branch
      %13 = sbr.rel target = $region3
    $region8: #{tpu_custom_call.1} parent=1 // loop_exit
      _
    %240 = vsyncpa [#allocation3], 1
    %s241 = scalar_lea.sflag [#allocation3], 1
    %242 = vsyncpa %s241, 1
    %243 = vsyncpa [#allocation4], 1
    %s244 = scalar_lea.sflag [#allocation4], 1
    %245 = vsyncpa %s244, 1

</llo_original>
